<compile_context>
chip_gen: v6e
topology: v6e:2x2x1
jax: 0.10.0
libtpu: 0.0.40
codegen_flags: <defaults>
</compile_context>

<pallas_src>
import jax
import jax.numpy as jnp
from jax.experimental import pallas as pl
from jax.experimental.pallas import tpu as pltpu


def _copy_kernel(x_ref, o_ref):
    # Pure lane-dense tile copy: vld -> vst, no relayout, no masking for
    # interior tiles (tile shapes obey the (sublane, 128) rules below).
    o_ref[...] = x_ref[...]


def _choose_tiles(n: int, flat: int, itemsize: int):
    """Pick (TB, TF) tile sizes for a lane-dense 2D streaming copy."""
    lane = 128
    # Sublane packing unit per dtype width (f32:8, bf16:16, int8/fp8:32).
    sub = {4: 8, 2: 16, 1: 32}.get(itemsize, 8)
    target_tile_bytes = 2 * 1024 * 1024  # ~2 MiB/tile -> ~8 MiB double-buffered

    # Lane (last) dim: full extent when it is not a multiple of 128 (required
    # by the BlockSpec rules for small/odd extents); otherwise a large multiple
    # of 128 (capped) so stores are unmasked and DMAs are wide.
    if flat % lane != 0:
        tf = flat
    else:
        tf = min(flat, 8 * 1024)

    # Sublane (second-minor) dim: as many rows as fit the per-tile byte budget,
    # rounded to the sublane unit.  If the batch is smaller than one sublane
    # unit, use the full extent (allowed by the BlockSpec rules).
    rows = max(sub, target_tile_bytes // max(1, tf * itemsize))
    tb = min(n, (rows // sub) * sub)
    tb = max(tb, sub)
    if n < sub or n <= tb:
        tb = n  # full extent (always legal)
    return tb, tf


def flatten_pallas(x: jax.Array) -> jax.Array:
    """Equivalent of torch: x.view(x.size(0), -1).

    The reshape itself happens in the wrapper (free, metadata-only in XLA);
    the Pallas kernel is a lane-dense tiled copy of the already-2D view.
    For production you would just `return jnp.reshape(x, (n, -1))` and skip
    the kernel entirely.
    """
    n = x.shape[0]
    flat = 1
    for d in x.shape[1:]:
        flat *= d

    # Free, metadata-only collapse of trailing dims (row-major == torch .view
    # on a contiguous NCHW tensor).
    x2 = jnp.reshape(x, (n, flat))

    if n == 0 or flat == 0:
        return x2  # nothing to copy

    itemsize = jnp.dtype(x.dtype).itemsize
    tb, tf = _choose_tiles(n, flat, itemsize)

    grid = (pl.cdiv(n, tb), pl.cdiv(flat, tf))

    return pl.pallas_call(
        _copy_kernel,
        out_shape=jax.ShapeDtypeStruct((n, flat), x.dtype),
        grid=grid,
        in_specs=[pl.BlockSpec((tb, tf), lambda i, j: (i, j))],
        out_specs=pl.BlockSpec((tb, tf), lambda i, j: (i, j)),
        compiler_params=pltpu.CompilerParams(
            dimension_semantics=("parallel", "parallel"),
        ),
    )(x2)


if __name__ == "__main__":
    key = jax.random.PRNGKey(0)
    # Small NCHW input consistent with a conv-feature-map flatten:
    # batch=2, channels=4, spatial=16x16 -> output (2, 1024)
    x = jax.random.normal(key, (2, 4, 16, 16), dtype=jnp.float32)

    out = flatten_pallas(x)
    out = jax.block_until_ready(out)

    # Reference check (== torch .view on a contiguous NCHW tensor)
    ref = x.reshape(x.shape[0], -1)
    assert out.shape == (2, 4 * 16 * 16), out.shape
    assert out.dtype == x.dtype
    assert bool(jnp.array_equal(out, ref))

    print("KERNEL_OK")
</pallas_src>

<mosaic_0001>
module attributes {stable_mosaic.version = 11 : i64} {
  func.func @_copy_kernel(%arg0: i32, %arg1: i32, %arg2: memref<2x1024xf32, #tpu.memory_space<vmem>>, %arg3: memref<2x1024xf32, #tpu.memory_space<vmem>>) attributes {dimension_semantics = [#tpu.dimension_semantics<parallel>, #tpu.dimension_semantics<parallel>], iteration_bounds = array<i64: 1, 1>, scalar_prefetch = 0 : i64, scratch_operands = 0 : i64, tpu.core_type = #tpu.core_type<tc>, window_params = [{transform_indices = @transform_0, window_bounds = array<i64: 2, 1024>}, {transform_indices = @transform_1, window_bounds = array<i64: 2, 1024>}]} {
    %c0 = arith.constant 0 : index
    %c0_0 = arith.constant 0 : index
    %0 = vector.load %arg2[%c0, %c0_0] : memref<2x1024xf32, #tpu.memory_space<vmem>>, vector<2x1024xf32>
    %c0_1 = arith.constant 0 : index
    %c0_2 = arith.constant 0 : index
    %1 = vector.load %arg3[%c0_1, %c0_2] : memref<2x1024xf32, #tpu.memory_space<vmem>>, vector<2x1024xf32>
    tpu.vector_store %arg3[%c0_1, %c0_2], %0 {strides = array<i32>} : memref<2x1024xf32, #tpu.memory_space<vmem>>, vector<2x1024xf32>,
    return
  }
  func.func @transform_0(%arg0: i32, %arg1: i32) -> (i32, i32) {
    %c0_i32 = arith.constant 0 : i32
    return %arg0, %arg1 : i32, i32
  }
  func.func @transform_1(%arg0: i32, %arg1: i32) -> (i32, i32) {
    %c0_i32 = arith.constant 0 : i32
    return %arg0, %arg1 : i32, i32
  }
}

</mosaic_0001>

<llo_original>
// kernel: tpu_custom_call.1
$region0: #{tpu_custom_call.1}
  #allocation0 [shape = 'u32[]', space=smem, size = 0x4, offset = 0x4, fixed_abs, tag = 'smem constant byte address 0x4 - core index']
  #allocation1 [shape = 'u32[144,128]{1,0:T(1,128)}', space=vmem, size = 0x12000, scoped, tag = 'internal scratch']
  %s0 = inlined_call_operand.hbm [shape: f32[2,1024], index: 0, kind: input, shape index: {}]
  %s1 = inlined_call_operand.hbm [shape: f32[2,1024], index: 1, kind: output, shape index: {}]
  %s2 = sld [smem:[#allocation0]]
  $region18: #{tpu_custom_call.1} parent=0
    _
  %s4 = ssub.s32 1, %s2
  %s5 = scalar_select 0, %s4, %s2
  $region1: #{tpu_custom_call.1} parent=0
    #allocation2 [shape = 'u8[8192]{0}', space=vmem, size = 0x2000, scoped, tag = 'input window, operand 0, single buffered']
    #allocation3 [shape = 's32[1]{0}', space=sflag, size = 0x4, scoped, tag = 'scoped memory for tpu_custom_call.1']
    #allocation4 [shape = 's32[1]{0}', space=sflag, size = 0x4, scoped, tag = 'scoped memory for tpu_custom_call.1']
    #allocation5 [shape = 'u8[8192]{0}', space=vmem, size = 0x2000, scoped, tag = 'output window, operand 0, single buffered']
    %6 = vsyncpa [#allocation3], 0
    %7 = vsyncpa [#allocation4], 0
    // Predicated region
    $region2: #{tpu_custom_call.1} parent=1 // pred_check
      _
    $region3: #{tpu_custom_call.1} parent=1 // pred_check_branch
      %9 = sbr.rel (0) target = $region5
    $region4: #{tpu_custom_call.1} parent=1 // pred_region
      %s11 = ssub.s32 256, 256
      %12 = vsyncadd [#allocation3], %s11
      %s14 = sshll.u32 [#allocation2], 4
      %s15 = int_to_ptr.vmem [resolvable:$true] %s14
      %17 = dma.hbm_to_vmem [thread:$0]  %s0, 256, %s15, [#allocation3]
    $region5: #{tpu_custom_call.1} parent=1 // pred_fallthru
      _
    // Predicated region
    $region6: #{tpu_custom_call.1} parent=1 // pred_check
      _
    $region7: #{tpu_custom_call.1} parent=1 // pred_check_branch
      %19 = sbr.rel (0) target = $region9
    $region8: #{tpu_custom_call.1} parent=1 // pred_region
      %20 = dma.done [#allocation3], 256
    $region9: #{tpu_custom_call.1} parent=1 // pred_fallthru
      _
    %v21 = vld [vmem:[#allocation2] sm:$0xff]
    %v22 = vld [vmem:[#allocation2 + $0x8] sm:$0xff]
    %23 = vst [vmem:[#allocation5] sm:$0xff] %v21
    %24 = vst [vmem:[#allocation5 + $0x8] sm:$0xff] %v22
    // Predicated region
    $region10: #{tpu_custom_call.1} parent=1 // pred_check
      _
    $region11: #{tpu_custom_call.1} parent=1 // pred_check_branch
      %26 = sbr.rel (0) target = $region13
    $region12: #{tpu_custom_call.1} parent=1 // pred_region
      %s28 = ssub.s32 256, 256
      %29 = vsyncadd [#allocation4], %s28
      %s31 = sshll.u32 [#allocation5], 4
      %s32 = int_to_ptr.vmem [resolvable:$true] %s31
      %34 = dma.vmem_to_hbm [thread:$0]  %s32, 256, %s1, [#allocation4]
    $region13: #{tpu_custom_call.1} parent=1 // pred_fallthru
      _
    // Predicated region
    $region14: #{tpu_custom_call.1} parent=1 // pred_check
      _
    $region15: #{tpu_custom_call.1} parent=1 // pred_check_branch
      %36 = sbr.rel (0) target = $region17
    $region16: #{tpu_custom_call.1} parent=1 // pred_region
      %37 = dma.done [#allocation4], 256
    $region17: #{tpu_custom_call.1} parent=1 // pred_fallthru
      _
    %38 = vsyncpa [#allocation3], 1
    %39 = vsyncpa [#allocation4], 1

</llo_original>
